<compile_context>
chip_gen: v7x
topology: tpu7x:2x2x1
jax: 0.10.0
libtpu: 0.0.40
codegen_flags: <defaults>
</compile_context>

<pallas_src>
import jax
import jax.numpy as jnp
from jax.experimental import pallas as pl
from jax.experimental.pallas import tpu as pltpu

_LANE = 128


def _add_scale_kernel(inv_t_ref, x0_ref, x1_ref, o_ref):
    """One grid step = one (1, TS, 128) tile of one batch element."""
    inv_t = inv_t_ref[pl.program_id(0)]          # per-batch scalar from SMEM
    o_ref[...] = (x0_ref[...] + x1_ref[...]) * inv_t


def _pick_tile_rows(rows, max_rows=1024):
    """Choose a sublane tile size: multiple of 8 (or the full dim), <= max_rows.

    Prefers an exact divisor of `rows` so no partial (masked) tiles are needed.
    max_rows=1024 -> 1024*128*4B = 512 KiB per array per buffer: with 3 arrays
    x 2 pipeline buffers that is ~3 MiB, comfortably inside v5e/v6e/v7x scoped
    VMEM without raising vmem_limit_bytes.
    """
    if rows <= max_rows:
        return rows                               # full dim -> always legal
    ts = max_rows - (max_rows % 8)
    while ts >= 8:
        if rows % ts == 0:
            return ts
        ts -= 8
    # No clean divisor: fall back to partial last tile (Pallas masks it).
    return max_rows - (max_rows % 8)


def base_model_forward(x0, x1, t, *, max_tile_rows=1024):
    """(x0 + x1) / t with per-batch scalar t, computed in a Pallas kernel.

    x0, x1: (B, C, H, W) float32
    t:      (B, 1, 1, 1) float32
    """
    assert x0.shape == x1.shape
    B, C, H, W = x0.shape
    N = C * H * W

    x0_f = x0.reshape(B, N)
    x1_f = x1.reshape(B, N)

    pad = (-N) % _LANE
    if pad:
        # TODO(synk): ragged lane tail — padded fallback costs an extra copy;
        # a masked-store tail kernel would avoid it.
        x0_f = jnp.pad(x0_f, ((0, 0), (0, pad)))
        x1_f = jnp.pad(x1_f, ((0, 0), (0, pad)))
    Np = N + pad
    R = Np // _LANE

    # Lane/sublane-dense 3D view; contiguous reshape -> no copy.
    x0_v = x0_f.reshape(B, R, _LANE)
    x1_v = x1_f.reshape(B, R, _LANE)

    ts = _pick_tile_rows(R, max_tile_rows)
    n_tiles = pl.cdiv(R, ts)

    # Precompute per-batch reciprocal (B scalars — negligible) -> SMEM prefetch.
    inv_t = (1.0 / t.reshape(B)).astype(jnp.float32)

    tile_spec = pl.BlockSpec((1, ts, _LANE), lambda b, j, inv_t_ref: (b, j, 0))

    out_v = pl.pallas_call(
        _add_scale_kernel,
        out_shape=jax.ShapeDtypeStruct((B, R, _LANE), x0.dtype),
        grid_spec=pltpu.PrefetchScalarGridSpec(
            num_scalar_prefetch=1,
            grid=(B, n_tiles),
            in_specs=[tile_spec, tile_spec],
            out_specs=tile_spec,
        ),
        compiler_params=pltpu.CompilerParams(
            dimension_semantics=("parallel", "parallel")),
    )(inv_t, x0_v, x1_v)

    out_f = out_v.reshape(B, Np)
    if pad:
        out_f = out_f[:, :N]
    return out_f.reshape(B, C, H, W)


def init_params(key):
    """Deterministic init of the module's (unused in forward) nn.Linear(3, 64)."""
    k_w, k_b = jax.random.split(key)
    bound = 1.0 / jnp.sqrt(3.0)
    w = jax.random.uniform(k_w, (64, 3), jnp.float32, -bound, bound)
    b = jax.random.uniform(k_b, (64,), jnp.float32, -bound, bound)
    return {"layer": {"weight": w, "bias": b}}   # not used by forward


if __name__ == "__main__":
    key = jax.random.PRNGKey(0)
    k0, k1, kt, kp = jax.random.split(key, 4)

    B, C, H, W = 2, 4, 16, 16
    x0 = jax.random.uniform(k0, (B, C, H, W), jnp.float32, 0.0, 255.0)
    x1 = jax.random.uniform(k1, (B, C, H, W), jnp.float32, 0.0, 255.0)
    t = jax.random.uniform(kt, (B, 1, 1, 1), jnp.float32, 0.1, 1.0)

    _ = init_params(kp)  # unused Linear(3, 64) parameters

    out = jax.block_until_ready(base_model_forward(x0, x1, t))

    # Reference check in plain JAX (reciprocal-multiply vs divide: ~1-2 ulp).
    ref = (x0 + x1) / t
    assert out.shape == (B, C, H, W)
    assert jnp.allclose(out, ref, rtol=1e-5, atol=1e-5)

    print("KERNEL_OK")
</pallas_src>

<mosaic_0001>
module attributes {stable_mosaic.version = 11 : i64} {
  func.func @_add_scale_kernel(%arg0: i32, %arg1: i32, %arg2: memref<2xf32, #tpu.memory_space<smem>>, %arg3: memref<1x8x128xf32, #tpu.memory_space<vmem>>, %arg4: memref<1x8x128xf32, #tpu.memory_space<vmem>>, %arg5: memref<1x8x128xf32, #tpu.memory_space<vmem>>) attributes {dimension_semantics = [#tpu.dimension_semantics<parallel>, #tpu.dimension_semantics<parallel>], iteration_bounds = array<i64: 2, 1>, scalar_prefetch = 1 : i64, scratch_operands = 0 : i64, tpu.core_type = #tpu.core_type<tc>, window_params = [{transform_indices = @transform_0, window_bounds = array<i64: 1, 8, 128>}, {transform_indices = @transform_1, window_bounds = array<i64: 1, 8, 128>}, {transform_indices = @transform_2, window_bounds = array<i64: 1, 8, 128>}]} {
    %0 = arith.index_cast %arg0 : i32 to index
    %1 = memref.load %arg2[%0] : memref<2xf32, #tpu.memory_space<smem>>
    %c0 = arith.constant 0 : index
    %c0_0 = arith.constant 0 : index
    %c0_1 = arith.constant 0 : index
    %2 = vector.load %arg3[%c0, %c0_0, %c0_1] : memref<1x8x128xf32, #tpu.memory_space<vmem>>, vector<1x8x128xf32>
    %c0_2 = arith.constant 0 : index
    %c0_3 = arith.constant 0 : index
    %c0_4 = arith.constant 0 : index
    %3 = vector.load %arg4[%c0_2, %c0_3, %c0_4] : memref<1x8x128xf32, #tpu.memory_space<vmem>>, vector<1x8x128xf32>
    %4 = arith.addf %2, %3 : vector<1x8x128xf32>
    %5 = vector.broadcast %1 : f32 to vector<1x8x128xf32>
    %6 = arith.mulf %4, %5 : vector<1x8x128xf32>
    %c0_5 = arith.constant 0 : index
    %c0_6 = arith.constant 0 : index
    %c0_7 = arith.constant 0 : index
    %7 = vector.load %arg5[%c0_5, %c0_6, %c0_7] : memref<1x8x128xf32, #tpu.memory_space<vmem>>, vector<1x8x128xf32>
    tpu.vector_store %arg5[%c0_5, %c0_6, %c0_7], %6 {strides = array<i32>} : memref<1x8x128xf32, #tpu.memory_space<vmem>>, vector<1x8x128xf32>,
    return
  }
  func.func @transform_0(%arg0: i32, %arg1: i32, %arg2: memref<2xf32, #tpu.memory_space<smem>>) -> (i32, i32, i32) {
    %c0_i32 = arith.constant 0 : i32
    %c0_i32_0 = arith.constant 0 : i32
    return %arg0, %arg1, %c0_i32 : i32, i32, i32
  }
  func.func @transform_1(%arg0: i32, %arg1: i32, %arg2: memref<2xf32, #tpu.memory_space<smem>>) -> (i32, i32, i32) {
    %c0_i32 = arith.constant 0 : i32
    %c0_i32_0 = arith.constant 0 : i32
    return %arg0, %arg1, %c0_i32 : i32, i32, i32
  }
  func.func @transform_2(%arg0: i32, %arg1: i32, %arg2: memref<2xf32, #tpu.memory_space<smem>>) -> (i32, i32, i32) {
    %c0_i32 = arith.constant 0 : i32
    %c0_i32_0 = arith.constant 0 : i32
    return %arg0, %arg1, %c0_i32 : i32, i32, i32
  }
}

</mosaic_0001>

<llo_original>
// kernel: tpu_custom_call.1
$region0: #{tpu_custom_call.1}
  #allocation0 [shape = 'u32[]', space=smem, size = 0x4, offset = 0x4, fixed_abs, tag = 'smem constant byte address 0x4 - core index']
  #allocation1 [shape = 'u32[144,128]{1,0:T(1,128)}', space=vmem, size = 0x12000, scoped, tag = 'internal scratch']
  #allocation2 [shape = 's32[1]{0}', space=sflag, size = 0x4, scoped, tag = 'scoped memory for tpu_custom_call.1']
  #allocation3 [shape = 'u8[512]{0}', space=smem, size = 0x200, scoped, tag = 'prefetched SMEM operand 0']
  %s0 = inlined_call_operand.hbm [shape: f32[2], index: 0, kind: input, shape index: {}]
  %s1 = inlined_call_operand.hbm [shape: f32[2,8,128], index: 1, kind: input, shape index: {}]
  %s2 = inlined_call_operand.hbm [shape: f32[2,8,128], index: 2, kind: input, shape index: {}]
  %s3 = inlined_call_operand.hbm [shape: f32[2,8,128], index: 3, kind: output, shape index: {}]
  %s4 = sld [smem:[#allocation0]]
  $region49: #{tpu_custom_call.1} parent=0
    _
  %s6 = ssub.s32 1, %s4
  %s7 = scalar_select 0, %s6, %s4
  %9 = dma.hbm_to_smem %s0, 16, [#allocation3], [#allocation2]
  %10 = dma.done [#allocation2], 16
  %11 = sfence
  $region1: #{tpu_custom_call.1} parent=0
    #allocation4 [shape = 'u8[8192]{0}', space=vmem, size = 0x2000, scoped, tag = 'input window, operand 1']
    #allocation5 [shape = 's32[2]{0}', space=sflag, size = 0x8, scoped, tag = 'scoped memory for tpu_custom_call.1']
    #allocation6 [shape = 's32[2]{0}', space=sflag, size = 0x8, scoped, tag = 'scoped memory for tpu_custom_call.1']
    #allocation7 [shape = 'u8[8192]{0}', space=vmem, size = 0x2000, scoped, tag = 'input window, operand 2']
    #allocation8 [shape = 's32[2]{0}', space=sflag, size = 0x8, scoped, tag = 'scoped memory for tpu_custom_call.1']
    #allocation9 [shape = 'u8[8192]{0}', space=vmem, size = 0x2000, scoped, tag = 'output window, operand 0']
    %12 = vsyncpa [#allocation5], 0
    %s13 = scalar_lea.sflag [#allocation5], 1
    %14 = vsyncpa %s13, 0
    %15 = vsyncpa [#allocation8], 0
    %s16 = scalar_lea.sflag [#allocation8], 1
    %17 = vsyncpa %s16, 0
    %18 = vsyncpa [#allocation6], 0
    %s19 = scalar_lea.sflag [#allocation6], 1
    %20 = vsyncpa %s19, 0
    loop: start=0, step=1, limit=4
    $region2: #{tpu_custom_call.1} parent=1 // loop_pre_header
      _
    $region3: #{tpu_custom_call.1} parent=1 // loop_header
      %s22 = sphi 0, %s26
      %p23 = scmp.ge.s32.totalorder %s22, 4
      %s29 = sphi 0, %s41
      %s30 = sphi 0, %s37
      %s31 = sphi 0, %s29
      %s32 = sphi 0, %s30
      %s33 = sphi 0, %s31
      %s34 = sphi 0, %s32
      %s46 = sphi 0, %s48
      %s49 = sphi 0, %s46
      %s50 = sphi 0, %s49
      %s66 = sphi 0, %s50
      %s74 = sphi 0, %s76
      %s77 = sphi 0, %s74
      %s78 = sphi 0, %s77
      %s94 = sphi 0, %s78
      %s102 = sphi 0, %s104
      %s105 = sphi 0, %s102
      %s106 = sphi 0, %s105
      %s122 = sphi 0, %s106
    $region4: #{tpu_custom_call.1} parent=1 // loop_header_branch
      %25 = sbr.rel (%p23) target = $region8
    $region5: #{tpu_custom_call.1} parent=1 // loop_body
      %s27 = ssub.s32 %s22, 1
      %s28 = ssub.s32 %s22, 2
      %s35 = sadd.s32 1, %s30
      %p36 = scmp.ge.s32.totalorder %s35, 1
      %s37 = scalar_select %p36, 0, %s35
      %s38 = sadd.s32 1, %s29
      %s39 = scalar_select %p36, %s38, %s29
      %p40 = scmp.ge.s32.totalorder %s39, 2
      %s41 = scalar_select %p40, 0, %s39
      %s42 = ssub.s32 %s29, %s41
      %s43 = ssub.s32 %s30, %s37
      %s44 = sor.u32 %s42, %s43
      %p45 = scmp.eq.s32.totalorder %s44, 0
      %s47 = sadd.s32 %s46, 1
      %s48 = scalar_select %p45, %s46, %s47
      %p51 = pneg %p45
      %p52 = scmp.eq.s32.totalorder %s22, 1
      %p53 = por %p51, %p52
      %p54 = scmp.ne.s32.totalorder %s46, %s49
      %p55 = scmp.eq.s32.totalorder %s22, 0
      %p56 = por %p54, %p55
      %p57 = scmp.ne.s32.totalorder %s46, %s49
      %p58 = scmp.eq.s32.totalorder %s27, 1
      %p59 = por %p57, %p58
      %p60 = scmp.ne.s32.totalorder %s49, %s50
      %p61 = scmp.eq.s32.totalorder %s27, 0
      %p62 = por %p60, %p61
      %p63 = scmp.ne.s32.totalorder %s49, %s50
      %p64 = scmp.eq.s32.totalorder %s28, 1
      %p65 = por %p63, %p64
      %p67 = scmp.ne.s32.totalorder %s50, %s66
      %p68 = scmp.eq.s32.totalorder %s28, 0
      %p69 = por %p67, %p68
      %s70 = ssub.s32 %s29, %s41
      %s71 = ssub.s32 %s30, %s37
      %s72 = sor.u32 %s70, %s71
      %p73 = scmp.eq.s32.totalorder %s72, 0
      %s75 = sadd.s32 %s74, 1
      %s76 = scalar_select %p73, %s74, %s75
      %p79 = pneg %p73
      %p80 = scmp.eq.s32.totalorder %s22, 1
      %p81 = por %p79, %p80
      %p82 = scmp.ne.s32.totalorder %s74, %s77
      %p83 = scmp.eq.s32.totalorder %s22, 0
      %p84 = por %p82, %p83
      %p85 = scmp.ne.s32.totalorder %s74, %s77
      %p86 = scmp.eq.s32.totalorder %s27, 1
      %p87 = por %p85, %p86
      %p88 = scmp.ne.s32.totalorder %s77, %s78
      %p89 = scmp.eq.s32.totalorder %s27, 0
      %p90 = por %p88, %p89
      %p91 = scmp.ne.s32.totalorder %s77, %s78
      %p92 = scmp.eq.s32.totalorder %s28, 1
      %p93 = por %p91, %p92
      %p95 = scmp.ne.s32.totalorder %s78, %s94
      %p96 = scmp.eq.s32.totalorder %s28, 0
      %p97 = por %p95, %p96
      %s98 = ssub.s32 %s29, %s41
      %s99 = ssub.s32 %s30, %s37
      %s100 = sor.u32 %s98, %s99
      %p101 = scmp.eq.s32.totalorder %s100, 0
      %s103 = sadd.s32 %s102, 1
      %s104 = scalar_select %p101, %s102, %s103
      %p107 = pneg %p101
      %p108 = scmp.eq.s32.totalorder %s22, 1
      %p109 = por %p107, %p108
      %p110 = scmp.ne.s32.totalorder %s102, %s105
      %p111 = scmp.eq.s32.totalorder %s22, 0
      %p112 = por %p110, %p111
      %p113 = scmp.ne.s32.totalorder %s102, %s105
      %p114 = scmp.eq.s32.totalorder %s27, 1
      %p115 = por %p113, %p114
      %p116 = scmp.ne.s32.totalorder %s105, %s106
      %p117 = scmp.eq.s32.totalorder %s27, 0
      %p118 = por %p116, %p117
      %p119 = scmp.ne.s32.totalorder %s105, %s106
      %p120 = scmp.eq.s32.totalorder %s28, 1
      %p121 = por %p119, %p120
      %p123 = scmp.ne.s32.totalorder %s106, %s122
      %p124 = scmp.eq.s32.totalorder %s28, 0
      %p125 = por %p123, %p124
      %p126 = scmp.le.s32.totalorder 1, %s22
      %p127 = scmp.lt.s32.totalorder %s22, 3
      %p128 = pnand %p126, %p127
      %p129 = pneg %p128
      // Predicated region
      $region9: #{tpu_custom_call.1} parent=5 // pred_check
        _
      $region10: #{tpu_custom_call.1} parent=5 // pred_check_branch
        %131 = sbr.rel (%p128) target = $region12
      $region11: #{tpu_custom_call.1} parent=5 // pred_region
        %s132 = ssub.s32 %s22, 1
      $region12: #{tpu_custom_call.1} parent=5 // pred_fallthru
        _
      %p133 = scmp.lt.s32.totalorder %s22, 2
      // Predicated region
      $region13: #{tpu_custom_call.1} parent=5 // pred_check
        %p134 = pneg %p133
      $region14: #{tpu_custom_call.1} parent=5 // pred_check_branch
        %136 = sbr.rel (%p134) target = $region16
      $region15: #{tpu_custom_call.1} parent=5 // pred_region
        // Predicated region
        $region17: #{tpu_custom_call.1} parent=15 // pred_check
          %p137 = pneg %p56
        $region18: #{tpu_custom_call.1} parent=15 // pred_check_branch
          %139 = sbr.rel (%p137) target = $region20
        $region19: #{tpu_custom_call.1} parent=15 // pred_region
          %s140 = sand.u32 %s46, 1
          %s141 = scalar_lea.sflag [#allocation5], %s140
          %s142 = sand.u32 %s46, 1
          %s143 = smul.addr %s142, 8
          %s144 = scalar_lea.vmem [#allocation4], %s143
          %s146 = ssub.s32 128, 128
          %147 = vsyncadd %s141, %s146
          %s148 = sadd.s32 %s30, %s29
          %s149 = smul.addr %s148, 128
          %s150 = scalar_lea.hbm %s1, %s149
          %s152 = sshll.u32 %s144, 4
          %s153 = int_to_ptr.vmem [resolvable:$true] %s152
          %155 = dma.hbm_to_vmem [thread:$0]  %s150, 128, %s153, %s141
        $region20: #{tpu_custom_call.1} parent=15 // pred_fallthru
          _
        // Predicated region
        $region21: #{tpu_custom_call.1} parent=15 // pred_check
          %p156 = pneg %p84
        $region22: #{tpu_custom_call.1} parent=15 // pred_check_branch
          %158 = sbr.rel (%p156) target = $region24
        $region23: #{tpu_custom_call.1} parent=15 // pred_region
          %s159 = sand.u32 %s74, 1
          %s160 = scalar_lea.sflag [#allocation8], %s159
          %s161 = sand.u32 %s74, 1
          %s162 = smul.addr %s161, 8
          %s163 = scalar_lea.vmem [#allocation7], %s162
          %s165 = ssub.s32 128, 128
          %166 = vsyncadd %s160, %s165
          %s167 = sadd.s32 %s30, %s29
          %s168 = smul.addr %s167, 128
          %s169 = scalar_lea.hbm %s2, %s168
          %s171 = sshll.u32 %s163, 4
          %s172 = int_to_ptr.vmem [resolvable:$true] %s171
          %174 = dma.hbm_to_vmem [thread:$0]  %s169, 128, %s172, %s160
        $region24: #{tpu_custom_call.1} parent=15 // pred_fallthru
          _
      $region16: #{tpu_custom_call.1} parent=5 // pred_fallthru
        _
      %p175 = scmp.le.s32.totalorder 1, %s22
      %p176 = scmp.lt.s32.totalorder %s22, 3
      %p177 = pnand %p175, %p176
      %p178 = pneg %p177
      // Predicated region
      $region25: #{tpu_custom_call.1} parent=5 // pred_check
        _
      $region26: #{tpu_custom_call.1} parent=5 // pred_check_branch
        %180 = sbr.rel (%p177) target = $region28
      $region27: #{tpu_custom_call.1} parent=5 // pred_region
        %s181 = ssub.s32 %s22, 1
        %s182 = sand.u32 %s49, 1
        %s183 = scalar_lea.sflag [#allocation5], %s182
        %s184 = sand.u32 %s49, 1
        %s185 = smul.addr %s184, 8
        %s186 = scalar_lea.vmem [#allocation4], %s185
        // Predicated region
        $region29: #{tpu_custom_call.1} parent=27 // pred_check
          %p187 = pneg %p62
        $region30: #{tpu_custom_call.1} parent=27 // pred_check_branch
          %189 = sbr.rel (%p187) target = $region32
        $region31: #{tpu_custom_call.1} parent=27 // pred_region
          %190 = dma.done %s183, 128
        $region32: #{tpu_custom_call.1} parent=27 // pred_fallthru
          _
        %s191 = sand.u32 %s77, 1
        %s192 = scalar_lea.sflag [#allocation8], %s191
        %s193 = sand.u32 %s77, 1
        %s194 = smul.addr %s193, 8
        %s195 = scalar_lea.vmem [#allocation7], %s194
        // Predicated region
        $region33: #{tpu_custom_call.1} parent=27 // pred_check
          %p196 = pneg %p90
        $region34: #{tpu_custom_call.1} parent=27 // pred_check_branch
          %198 = sbr.rel (%p196) target = $region36
        $region35: #{tpu_custom_call.1} parent=27 // pred_region
          %199 = dma.done %s192, 128
        $region36: #{tpu_custom_call.1} parent=27 // pred_fallthru
          _
        %s200 = sand.u32 %s49, 1
        %s201 = scalar_lea.sflag [#allocation5], %s200
        %s202 = sand.u32 %s49, 1
        %s203 = smul.addr %s202, 8
        %s204 = scalar_lea.vmem [#allocation4], %s203
        %p205 = pneg %p62
        %p206 = pneg %p59
        %s207 = sand.u32 %s77, 1
        %s208 = scalar_lea.sflag [#allocation8], %s207
        %s209 = sand.u32 %s77, 1
        %s210 = smul.addr %s209, 8
        %s211 = scalar_lea.vmem [#allocation7], %s210
        %p212 = pneg %p90
        %p213 = pneg %p87
        %p214 = pneg %p118
        %p215 = pneg %p115
        %s216 = sand.u32 %s105, 1
        %s217 = scalar_lea.sflag [#allocation6], %s216
        %s218 = sand.u32 %s105, 1
        %s219 = smul.addr %s218, 8
        %s220 = scalar_lea.vmem [#allocation9], %s219
        %s221 = sld [smem:[#allocation3 + %s31]]
        %v222 = vld [vmem:[%s186] sm:$0xff]
        %v223 = vld [vmem:[%s195] sm:$0xff]
        %v224 = vadd.f32 %v222, %v223
        %v225 = vstv %s221
        %v226 = vmul.f32 %v224, %v225
        %227 = vst [vmem:[%s220] sm:$0xff] %v226
        %s228 = sand.u32 %s105, 1
        %s229 = scalar_lea.sflag [#allocation6], %s228
        %s230 = sand.u32 %s105, 1
        %s231 = smul.addr %s230, 8
        %s232 = scalar_lea.vmem [#allocation9], %s231
        // Predicated region
        $region37: #{tpu_custom_call.1} parent=27 // pred_check
          %p233 = pneg %p115
        $region38: #{tpu_custom_call.1} parent=27 // pred_check_branch
          %235 = sbr.rel (%p233) target = $region40
        $region39: #{tpu_custom_call.1} parent=27 // pred_region
          %s237 = ssub.s32 128, 128
          %238 = vsyncadd %s229, %s237
          %s239 = sadd.s32 %s32, %s31
          %s240 = smul.addr %s239, 128
          %s241 = scalar_lea.hbm %s3, %s240
          %s243 = sshll.u32 %s232, 4
          %s244 = int_to_ptr.vmem [resolvable:$true] %s243
          %246 = dma.vmem_to_hbm [thread:$0]  %s244, 128, %s241, %s229
        $region40: #{tpu_custom_call.1} parent=27 // pred_fallthru
          _
      $region28: #{tpu_custom_call.1} parent=5 // pred_fallthru
        _
      %p247 = scmp.le.s32.totalorder 2, %s22
      // Predicated region
      $region41: #{tpu_custom_call.1} parent=5 // pred_check
        %p248 = pneg %p247
      $region42: #{tpu_custom_call.1} parent=5 // pred_check_branch
        %250 = sbr.rel (%p248) target = $region44
      $region43: #{tpu_custom_call.1} parent=5 // pred_region
        %s251 = ssub.s32 %s22, 2
        // Predicated region
        $region45: #{tpu_custom_call.1} parent=43 // pred_check
          %p252 = pneg %p121
        $region46: #{tpu_custom_call.1} parent=43 // pred_check_branch
          %254 = sbr.rel (%p252) target = $region48
        $region47: #{tpu_custom_call.1} parent=43 // pred_region
          %s255 = sand.u32 %s106, 1
          %s256 = scalar_lea.sflag [#allocation6], %s255
          %s257 = sand.u32 %s106, 1
          %s258 = smul.addr %s257, 8
          %s259 = scalar_lea.vmem [#allocation9], %s258
          %260 = dma.done %s256, 128
        $region48: #{tpu_custom_call.1} parent=43 // pred_fallthru
          _
      $region44: #{tpu_custom_call.1} parent=5 // pred_fallthru
        _
    $region6: #{tpu_custom_call.1} parent=1 // loop_footer
      %s26 = sadd.s32 1, %s22
    $region7: #{tpu_custom_call.1} parent=1 // loop_footer_branch
      %21 = sbr.rel target = $region3
    $region8: #{tpu_custom_call.1} parent=1 // loop_exit
      _
    %261 = vsyncpa [#allocation5], 1
    %s262 = scalar_lea.sflag [#allocation5], 1
    %263 = vsyncpa %s262, 1
    %264 = vsyncpa [#allocation8], 1
    %s265 = scalar_lea.sflag [#allocation8], 1
    %266 = vsyncpa %s265, 1
    %267 = vsyncpa [#allocation6], 1
    %s268 = scalar_lea.sflag [#allocation6], 1
    %269 = vsyncpa %s268, 1

</llo_original>
